<compile_context>
chip_gen: v7x
topology: tpu7x:2x2x1
jax: 0.10.0
libtpu: 0.0.40
codegen_flags: <defaults>
</compile_context>

<pallas_src>
import functools

import jax
import jax.numpy as jnp
from jax.experimental import pallas as pl
from jax.experimental.pallas import tpu as pltpu


def _round_up(x, m):
    return ((x + m - 1) // m) * m


def _vmem_capacity_bytes():
    try:
        info = pltpu.get_tpu_info()
        for attr in ("vmem_capacity_bytes", "vmem_size_bytes", "vmem_bytes"):
            v = getattr(info, attr, None)
            if v:
                return int(v)
    except Exception:
        pass
    return 64 << 20  # conservative fallback (v7x per-TC VMEM)


def _choose_tile(n):
    """Row-tile size, generation-aware (128MiB parts -> 512; 64MiB v7x -> <=256)."""
    cap_bytes = _vmem_capacity_bytes()
    cap = 512 if cap_bytes >= (128 << 20) else 256
    if cap_bytes < (128 << 20) and n > 32768:
        cap = 128  # keep [tile, N] adj slab + softmax temps inside 64 MiB
    if n <= 128:
        # Single tile covering the whole (padded) graph; 32-row multiple keeps
        # the int8 adjacency block on its (32, 128) native tiling.
        return _round_up(max(n, 8), 32)
    if n <= cap:
        return 128  # >= 2 grid steps (v7x dual-TC), 128-aligned lane dim for a_src^T
    return cap


def _vmem_limit(bytes_needed):
    cap = _vmem_capacity_bytes()
    return int(min(max(bytes_needed, 32 << 20), cap * 3 // 4))


def _const_spec(shape):
    """Spec for an input whose block index never changes: single-buffer it."""
    idx = lambda *args: (0,) * len(shape)
    buffered = getattr(pl, "Buffered", None)
    if buffered is not None:
        try:
            return pl.BlockSpec(shape, idx, pipeline_mode=buffered(1))
        except TypeError:  # pipeline_mode kwarg unavailable -> default buffering
            pass
    return pl.BlockSpec(shape, idx)


# ---------------------------------------------------------------------------
# Kernel 1: projection + attention-score reductions (row-tiled).
# ---------------------------------------------------------------------------
def _project_kernel(x_ref, w_ref, a_cat_ref, h_ref, ast_ref, ad_ref, *, heads):
    x = x_ref[...].astype(jnp.bfloat16)
    h = jnp.dot(x, w_ref[...], preferred_element_type=jnp.float32)        # [T, H*F]
    h_bf = h.astype(jnp.bfloat16)
    h_ref[...] = h_bf
    # Single bf16 MXU matmul against [A_src | A_dst] block-diagonal vectors.
    s = jnp.dot(h_bf, a_cat_ref[...], preferred_element_type=jnp.float32)  # [T, 2*heads]
    ast_ref[...] = jnp.transpose(s[:, :heads])                             # [heads, T]
    ad_ref[...] = s[:, heads:]                                             # [T, heads]


# ---------------------------------------------------------------------------
# Kernel 2: masked softmax attention + aggregation (row-tiled over targets).
# ---------------------------------------------------------------------------
def _gat_attn_kernel(h_ref, ast_ref, ad_ref, bias_ref, adj_ref, out_ref,
                     *, heads, f_out, concat, apply_elu):
    neg_slope = jnp.float32(0.2)     # GATConv default negative_slope
    big_neg = jnp.float32(-1e30)
    one = jnp.float32(1.0)

    mask = adj_ref[...].astype(jnp.int32) > 0     # [T, N], adj is int8 {0,1}
    ad = ad_ref[...]                              # [T, heads] f32
    ast = ast_ref[...]                            # [heads, N] f32
    bias = bias_ref[...]                          # [1, out_dim] f32

    def _elu(o):
        return jnp.where(o > 0, o, jnp.exp(jnp.minimum(o, 0.0)) - one)

    mean_acc = None
    for hd in range(heads):
        hh = h_ref[:, hd * f_out:(hd + 1) * f_out]               # [N, f_out] bf16
        # e[i, j] = LeakyReLU(a_dst[i] + a_src[j]), masked to incoming edges.
        e = ad[:, hd:hd + 1] + ast[hd:hd + 1, :]                 # [T, N]
        e = jnp.where(e > 0, e, neg_slope * e)
        e = jnp.where(mask, e, big_neg)

        # Stable softmax; masked entries underflow to exactly 0 (self-loops
        # guarantee a finite row max).  Normalization deferred past the matmul.
        m = jnp.max(e, axis=-1, keepdims=True)
        p = jnp.exp(e - m)                                       # [T, N], unnormalized
        denom = jnp.sum(p, axis=-1, keepdims=True)               # [T, 1]

        agg = jnp.dot(p.astype(jnp.bfloat16), hh,
                      preferred_element_type=jnp.float32)        # [T, f_out]
        agg = agg * pl.reciprocal(denom, approx=True)

        if concat:
            o = agg + bias[:, hd * f_out:(hd + 1) * f_out]
            if apply_elu:
                o = _elu(o)
            out_ref[:, hd * f_out:(hd + 1) * f_out] = o          # fused per-head store
        else:
            mean_acc = agg if mean_acc is None else mean_acc + agg

    if not concat:
        o = mean_acc * jnp.float32(1.0 / heads) + bias
        if apply_elu:
            o = _elu(o)
        out_ref[...] = o


def gat_layer(x, w, a_cat, bias, adj, *, heads, f_out, concat, apply_elu, tile):
    n_pad = adj.shape[0]
    f_in = x.shape[1]
    hf = heads * f_out
    out_dim = hf if concat else f_out
    grid = (n_pad // tile,)

    # --- projection + attention scores -------------------------------------
    proj_vmem = (2 * tile * f_in * 4 + w.size * 2 + a_cat.size * 2
                 + 2 * tile * hf * 2 + 4 * tile * heads * 4
                 + 2 * tile * hf * 4 + (1 << 20))
    h, ast, ad = pl.pallas_call(
        functools.partial(_project_kernel, heads=heads),
        grid=grid,
        in_specs=[pl.BlockSpec((tile, f_in), lambda i: (i, 0)),
                  _const_spec(w.shape),
                  _const_spec(a_cat.shape)],
        out_specs=(pl.BlockSpec((tile, hf), lambda i: (i, 0)),
                   pl.BlockSpec((heads, tile), lambda i: (0, i)),
                   pl.BlockSpec((tile, heads), lambda i: (i, 0))),
        out_shape=(jax.ShapeDtypeStruct((n_pad, hf), jnp.bfloat16),
                   jax.ShapeDtypeStruct((heads, n_pad), jnp.float32),
                   jax.ShapeDtypeStruct((n_pad, heads), jnp.float32)),
        compiler_params=pltpu.CompilerParams(
            dimension_semantics=("parallel",),
            vmem_limit_bytes=_vmem_limit(proj_vmem)),
    )(x, w, a_cat)

    # --- masked softmax + aggregation, tiled over target rows --------------
    attn_vmem = (2 * tile * n_pad            # adj int8, double-buffered
                 + n_pad * hf * 2            # h bf16, single-buffered resident
                 + heads * n_pad * 4         # a_src^T f32, resident
                 + 2 * tile * heads * 4      # a_dst tile
                 + 2 * tile * out_dim * 4    # out tile
                 + 3 * tile * n_pad * 4      # softmax temporaries
                 + (2 << 20))
    kernel = functools.partial(_gat_attn_kernel, heads=heads, f_out=f_out,
                               concat=concat, apply_elu=apply_elu)
    return pl.pallas_call(
        kernel,
        grid=grid,
        in_specs=[_const_spec((n_pad, hf)),                        # h (all sources)
                  _const_spec((heads, n_pad)),                     # a_src^T
                  pl.BlockSpec((tile, heads), lambda i: (i, 0)),   # a_dst row tile
                  _const_spec(bias.shape),
                  pl.BlockSpec((tile, n_pad), lambda i: (i, 0))],  # adj row tile (int8)
        out_specs=pl.BlockSpec((tile, out_dim), lambda i: (i, 0)),
        out_shape=jax.ShapeDtypeStruct((n_pad, out_dim), jnp.float32),
        compiler_params=pltpu.CompilerParams(
            dimension_semantics=("parallel",),
            vmem_limit_bytes=_vmem_limit(attn_vmem)),
    )(h, ast, ad, bias, adj)


def dense_adj_with_self_loops(edge_index, num_nodes, padded_nodes):
    """adj[i, j] = 1 iff edge j -> i; self-loops on real nodes (PyG default). int8."""
    src, dst = edge_index[0], edge_index[1]
    adj = jnp.zeros((padded_nodes, padded_nodes), jnp.int8)
    adj = adj.at[dst, src].set(1)
    idx = jnp.arange(num_nodes)
    adj = adj.at[idx, idx].set(1)          # remove+re-add self-loops == set diag
    return adj


def _glorot(key, shape):
    fan_in, fan_out = shape[-2], shape[-1]
    limit = jnp.sqrt(6.0 / (fan_in + fan_out))
    return jax.random.uniform(key, shape, jnp.float32, -limit, limit)


def _block_diag_att(att):
    """[heads, f_out] attention vectors -> block-diagonal [heads*f_out, heads]."""
    heads, f_out = att.shape
    bd = jnp.zeros((heads * f_out, heads), jnp.float32)
    for hd in range(heads):
        bd = bd.at[hd * f_out:(hd + 1) * f_out, hd].set(att[hd])
    return bd


class AuthorGATPallas:
    """JAX/Pallas port of AuthorGAT (eval-mode forward)."""

    def __init__(self, in_channels, hidden_channels, out_channels, heads, key):
        k = jax.random.split(key, 6)
        # conv1: GATConv(in_channels, hidden_channels, heads=heads, concat=True)
        self.heads1 = heads
        self.f1 = hidden_channels
        self.w1 = _glorot(k[0], (in_channels, heads * hidden_channels)).astype(jnp.bfloat16)
        a_src1 = _block_diag_att(_glorot(k[1], (heads, hidden_channels)))
        a_dst1 = _block_diag_att(_glorot(k[2], (heads, hidden_channels)))
        self.a_cat1 = jnp.concatenate([a_src1, a_dst1], axis=1).astype(jnp.bfloat16)
        self.b1 = jnp.zeros((1, heads * hidden_channels), jnp.float32)
        # conv2: GATConv(hidden_channels*heads, out_channels, heads=1, concat=False)
        self.heads2 = 1
        self.f2 = out_channels
        self.w2 = _glorot(k[3], (heads * hidden_channels, out_channels)).astype(jnp.bfloat16)
        a_src2 = _block_diag_att(_glorot(k[4], (1, out_channels)))
        a_dst2 = _block_diag_att(_glorot(k[5], (1, out_channels)))
        self.a_cat2 = jnp.concatenate([a_src2, a_dst2], axis=1).astype(jnp.bfloat16)
        self.b2 = jnp.zeros((1, out_channels), jnp.float32)

    def __call__(self, x, edge_index):
        n = x.shape[0]
        tile = _choose_tile(n)
        n_pad = _round_up(n, tile)
        adj = dense_adj_with_self_loops(edge_index, n, n_pad)
        if n_pad != n:
            x = jnp.zeros((n_pad, x.shape[1]), jnp.float32).at[:n].set(x)
        # x = dropout(x)  -> identity in eval mode
        h = gat_layer(x, self.w1, self.a_cat1, self.b1, adj,
                      heads=self.heads1, f_out=self.f1, concat=True,
                      apply_elu=True, tile=tile)
        # h = dropout(h)  -> identity in eval mode
        out = gat_layer(h, self.w2, self.a_cat2, self.b2, adj,
                        heads=self.heads2, f_out=self.f2, concat=False,
                        apply_elu=False, tile=tile)
        return out[:n]


if __name__ == "__main__":
    key = jax.random.PRNGKey(0)
    k_x, k_e, k_p = jax.random.split(key, 3)

    num_nodes = 16
    in_channels = 8
    hidden_channels = 8
    out_channels = 4
    heads = 2
    num_edges = 40

    x = jax.random.normal(k_x, (num_nodes, in_channels), jnp.float32)
    edge_index = jax.random.randint(k_e, (2, num_edges), 0, num_nodes, jnp.int32)

    model = AuthorGATPallas(in_channels, hidden_channels, out_channels, heads, k_p)
    out = jax.block_until_ready(model(x, edge_index))

    assert out.shape == (num_nodes, out_channels), out.shape
    assert bool(jnp.all(jnp.isfinite(out))), "non-finite output"
    print("KERNEL_OK")
</pallas_src>

<mosaic_0001>
module attributes {stable_mosaic.version = 11 : i64} {
  func.func @_project_kernel(%arg0: i32, %arg1: memref<32x8xf32, #tpu.memory_space<vmem>>, %arg2: memref<8x16xbf16, #tpu.memory_space<vmem>>, %arg3: memref<16x4xbf16, #tpu.memory_space<vmem>>, %arg4: memref<32x16xbf16, #tpu.memory_space<vmem>>, %arg5: memref<2x32xf32, #tpu.memory_space<vmem>>, %arg6: memref<32x2xf32, #tpu.memory_space<vmem>>) attributes {dimension_semantics = [#tpu.dimension_semantics<parallel>], iteration_bounds = array<i64: 1>, scalar_prefetch = 0 : i64, scratch_operands = 0 : i64, tpu.core_type = #tpu.core_type<tc>, window_params = [{transform_indices = @transform_0, window_bounds = array<i64: 32, 8>}, {pipeline_mode = #tpu.pipeline_mode<synchronous>, transform_indices = @transform_1, window_bounds = array<i64: 8, 16>}, {pipeline_mode = #tpu.pipeline_mode<synchronous>, transform_indices = @transform_2, window_bounds = array<i64: 16, 4>}, {transform_indices = @transform_3, window_bounds = array<i64: 32, 16>}, {transform_indices = @transform_4, window_bounds = array<i64: 2, 32>}, {transform_indices = @transform_5, window_bounds = array<i64: 32, 2>}]} {
    %c0 = arith.constant 0 : index
    %c0_0 = arith.constant 0 : index
    %0 = vector.load %arg1[%c0, %c0_0] : memref<32x8xf32, #tpu.memory_space<vmem>>, vector<32x8xf32>
    %1 = arith.truncf %0 : vector<32x8xf32> to vector<32x8xbf16>
    %c0_1 = arith.constant 0 : index
    %c0_2 = arith.constant 0 : index
    %2 = vector.load %arg2[%c0_1, %c0_2] : memref<8x16xbf16, #tpu.memory_space<vmem>>, vector<8x16xbf16>
    %cst = arith.constant dense<0.000000e+00> : vector<32x16xf32>
    %3 = tpu.matmul %1, %2, %cst {dimension_numbers = #tpu.dot_dimension_numbers<[1], [0], [0], [1], [0, 0, 1, 1], [], []>} : vector<32x8xbf16>, vector<8x16xbf16>, vector<32x16xf32> -> vector<32x16xf32>
    %4 = arith.truncf %3 : vector<32x16xf32> to vector<32x16xbf16>
    %c0_3 = arith.constant 0 : index
    %c0_4 = arith.constant 0 : index
    %5 = vector.load %arg4[%c0_3, %c0_4] : memref<32x16xbf16, #tpu.memory_space<vmem>>, vector<32x16xbf16>
    tpu.vector_store %arg4[%c0_3, %c0_4], %4 {strides = array<i32>} : memref<32x16xbf16, #tpu.memory_space<vmem>>, vector<32x16xbf16>,
    %c0_5 = arith.constant 0 : index
    %c0_6 = arith.constant 0 : index
    %6 = vector.load %arg3[%c0_5, %c0_6] : memref<16x4xbf16, #tpu.memory_space<vmem>>, vector<16x4xbf16>
    %cst_7 = arith.constant dense<0.000000e+00> : vector<32x4xf32>
    %7 = tpu.matmul %4, %6, %cst_7 {dimension_numbers = #tpu.dot_dimension_numbers<[1], [0], [0], [1], [0, 0, 1, 1], [], []>} : vector<32x16xbf16>, vector<16x4xbf16>, vector<32x4xf32> -> vector<32x4xf32>
    %8 = vector.extract_strided_slice %7 {offsets = [0, 0], sizes = [32, 2], strides = [1, 1]} : vector<32x4xf32> to vector<32x2xf32>
    %9 = tpu.transpose %8, [1, 0] : vector<32x2xf32> -> vector<2x32xf32>
    %c0_8 = arith.constant 0 : index
    %c0_9 = arith.constant 0 : index
    %10 = vector.load %arg5[%c0_8, %c0_9] : memref<2x32xf32, #tpu.memory_space<vmem>>, vector<2x32xf32>
    tpu.vector_store %arg5[%c0_8, %c0_9], %9 {strides = array<i32>} : memref<2x32xf32, #tpu.memory_space<vmem>>, vector<2x32xf32>,
    %11 = vector.extract_strided_slice %7 {offsets = [0, 2], sizes = [32, 2], strides = [1, 1]} : vector<32x4xf32> to vector<32x2xf32>
    %c0_10 = arith.constant 0 : index
    %c0_11 = arith.constant 0 : index
    %12 = vector.load %arg6[%c0_10, %c0_11] : memref<32x2xf32, #tpu.memory_space<vmem>>, vector<32x2xf32>
    tpu.vector_store %arg6[%c0_10, %c0_11], %11 {strides = array<i32>} : memref<32x2xf32, #tpu.memory_space<vmem>>, vector<32x2xf32>,
    return
  }
  func.func @transform_0(%arg0: i32) -> (i32, i32) {
    %c0_i32 = arith.constant 0 : i32
    %c0_i32_0 = arith.constant 0 : i32
    return %arg0, %c0_i32 : i32, i32
  }
  func.func @transform_1(%arg0: i32) -> (i32, i32) {
    %c0_i32 = arith.constant 0 : i32
    %c0_i32_0 = arith.constant 0 : i32
    %c0_i32_1 = arith.constant 0 : i32
    return %c0_i32, %c0_i32_0 : i32, i32
  }
  func.func @transform_2(%arg0: i32) -> (i32, i32) {
    %c0_i32 = arith.constant 0 : i32
    %c0_i32_0 = arith.constant 0 : i32
    %c0_i32_1 = arith.constant 0 : i32
    return %c0_i32, %c0_i32_0 : i32, i32
  }
  func.func @transform_3(%arg0: i32) -> (i32, i32) {
    %c0_i32 = arith.constant 0 : i32
    %c0_i32_0 = arith.constant 0 : i32
    return %arg0, %c0_i32 : i32, i32
  }
  func.func @transform_4(%arg0: i32) -> (i32, i32) {
    %c0_i32 = arith.constant 0 : i32
    %c0_i32_0 = arith.constant 0 : i32
    return %c0_i32, %arg0 : i32, i32
  }
  func.func @transform_5(%arg0: i32) -> (i32, i32) {
    %c0_i32 = arith.constant 0 : i32
    %c0_i32_0 = arith.constant 0 : i32
    return %arg0, %c0_i32 : i32, i32
  }
}

</mosaic_0001>

<llo_original>
// kernel: tpu_custom_call.1
$region0: #{tpu_custom_call.1}
  #allocation0 [shape = 'u32[]', space=smem, size = 0x4, offset = 0x4, fixed_abs, tag = 'smem constant byte address 0x4 - core index']
  #allocation1 [shape = 'u32[144,128]{1,0:T(1,128)}', space=vmem, size = 0x12000, scoped, tag = 'internal scratch']
  %s0 = inlined_call_operand.vmem [shape: f32[32,8], index: 0, kind: input, shape index: {}]
  %s1 = inlined_call_operand.vmem [shape: bf16[8,16], index: 1, kind: input, shape index: {}]
  %s2 = inlined_call_operand.vmem [shape: bf16[16,4], index: 2, kind: input, shape index: {}]
  %s3 = inlined_call_operand.vmem [shape: bf16[32,16], index: 3, kind: output, shape index: {0}]
  %s4 = inlined_call_operand.hbm [shape: f32[2,32], index: 4, kind: output, shape index: {1}]
  %s5 = inlined_call_operand.vmem [shape: f32[32,2], index: 5, kind: output, shape index: {2}]
  %6 = xla_tuple %s3, %s4, %s5
  %s7 = sld [smem:[#allocation0]]
  $region38: #{tpu_custom_call.1} parent=0
    _
  %s9 = ssub.s32 1, %s7
  %s10 = scalar_select 0, %s9, %s7
  $region1: #{tpu_custom_call.1} parent=0
    #allocation2 [shape = 'u8[1024]{0}', space=vmem, size = 0x400, scoped, tag = 'output window, operand 1, single buffered']
    #allocation3 [shape = 's32[1]{0}', space=sflag, size = 0x4, scoped, tag = 'scoped memory for tpu_custom_call.1']
    %11 = vsyncpa [#allocation3], 0
    // Predicated region
    $region2: #{tpu_custom_call.1} parent=1 // pred_check
      _
    $region3: #{tpu_custom_call.1} parent=1 // pred_check_branch
      %13 = sbr.rel (0) target = $region5
    $region4: #{tpu_custom_call.1} parent=1 // pred_region
      _
    $region5: #{tpu_custom_call.1} parent=1 // pred_fallthru
      _
    // Predicated region
    $region6: #{tpu_custom_call.1} parent=1 // pred_check
      _
    $region7: #{tpu_custom_call.1} parent=1 // pred_check_branch
      %15 = sbr.rel (0) target = $region9
    $region8: #{tpu_custom_call.1} parent=1 // pred_region
      _
    $region9: #{tpu_custom_call.1} parent=1 // pred_fallthru
      _
    // Predicated region
    $region10: #{tpu_custom_call.1} parent=1 // pred_check
      _
    $region11: #{tpu_custom_call.1} parent=1 // pred_check_branch
      %17 = sbr.rel (0) target = $region13
    $region12: #{tpu_custom_call.1} parent=1 // pred_region
      _
    $region13: #{tpu_custom_call.1} parent=1 // pred_fallthru
      _
    %v19 = vld [vmem:[%s0] sm:$0xff]
    %v20 = vld [vmem:[%s0 + $0x8] sm:$0xff]
    %v21 = vld [vmem:[%s0 + $0x10] sm:$0xff]
    %v22 = vld [vmem:[%s0 + $0x18] sm:$0xff]
    %v23 = vpack.c.bf16 %v20, %v19
    %v24 = vpack.c.bf16 %v22, %v21
    %v25 = vld [vmem:[%s1] sm:$0xf]
    %vm26 = vcmask 64512
    %v28 = vsel %vm26, %v23, 0
    %v31 = vsel %vm26, %v24, 0
    %vm33 = vcmask 1043456
    %v35 = vsel %vm33, %v25, 0
    %37 = vmatprep.subr.bf16.mxu0 0
    %38 = vmatpush1.bf16.msra.mxu0 %v35
    %39 = vmatprep.subr.bf16.mxu0 0
    %40 = vmatpush1.bf16.msra.mxu0 0
    %41 = vmatprep.subr.bf16.mxu0 0
    %42 = vmatpush1.bf16.msra.mxu0 0
    %43 = vmatprep.subr.bf16.mxu0 0
    %44 = vmatpush1.bf16.msra.mxu0 0
    %45 = vmatprep.subr.bf16.mxu0 0
    %46 = vmatpush1.bf16.msra.mxu0 0
    %47 = vmatprep.subr.bf16.mxu0 0
    %48 = vmatpush1.bf16.msra.mxu0 0
    %49 = vmatprep.subr.bf16.mxu0 0
    %50 = vmatpush1.bf16.msra.mxu0 0
    %51 = vmatprep.subr.bf16.mxu0 0
    %52 = vmatpush1.bf16.msra.mxu0 0
    %53 = vmatprep.subr.bf16.mxu0 0
    %54 = vmatpush1.bf16.msra.mxu0 0
    %55 = vmatprep.subr.bf16.mxu0 0
    %56 = vmatpush1.bf16.msra.mxu0 0
    %57 = vmatprep.subr.bf16.mxu0 0
    %58 = vmatpush1.bf16.msra.mxu0 0
    %59 = vmatprep.subr.bf16.mxu0 0
    %60 = vmatpush1.bf16.msra.mxu0 0
    %61 = vmatprep.subr.bf16.mxu0 0
    %62 = vmatpush1.bf16.msra.mxu0 0
    %63 = vmatprep.subr.bf16.mxu0 0
    %64 = vmatpush1.bf16.msra.mxu0 0
    %65 = vmatprep.subr.bf16.mxu0 0
    %66 = vmatpush1.bf16.msra.mxu0 0
    %67 = vmatprep.subr.bf16.mxu0 0
    %68 = vmatpush1.bf16.msra.mxu0 0
    %69 = vmatprep.mubr.bf16.mxu0 0
    %70 = vmatmul.mubr.bf16.gmra.mrb[0].mxu0 %v28
    %v71 = vpop.f32.mrb[0].mxu0
    %v72 = vadd.f32 0.0, %v71
    %v73 = vpop.f32.mrb[0].mxu0
    %v74 = vpop.f32.mrb[0].mxu0
    %v75 = vadd.f32 0.0, %v74
    %v76 = vpop.f32.mrb[0].mxu0
    %77 = vmatprep.mubr.bf16.mxu0 0
    %78 = vmatmul.mubr.bf16.gmra.mrb[0].mxu0 %v31
    %v79 = vpop.f32.mrb[0].mxu0
    %v80 = vadd.f32 0.0, %v79
    %v81 = vpop.f32.mrb[0].mxu0
    %v82 = vpop.f32.mrb[0].mxu0
    %v83 = vadd.f32 0.0, %v82
    %v84 = vpop.f32.mrb[0].mxu0
    %85 = vdwg.mxu0
    %v86 = vpack.c.bf16 %v75, %v72
    %v87 = vpack.c.bf16 %v83, %v80
    %v90 = vunpack.c.l.b16 %v86
    %v91 = vunpack.c.h.b16 %v86
    %v92 = vunpack.c.l.b16 %v87
    %v93 = vunpack.c.h.b16 %v87
    %v94 = vpack.c.b16 %v90, %v90
    %v95 = vpack.c.b16 %v91, %v91
    %v96 = vpack.c.b16 %v92, %v92
    %v97 = vpack.c.b16 %v93, %v93
    %vm102 = vcmask 125952
    %103 = vst.msk [vmem:[%s3] sm:$0xf] %vm102, %v94
    %104 = vst.msk [vmem:[%s3 + $0x4] sm:$0xf] %vm102, %v95
    %105 = vst.msk [vmem:[%s3 + $0x8] sm:$0xf] %vm102, %v96
    %106 = vst.msk [vmem:[%s3 + $0xc] sm:$0xf] %vm102, %v97
    %v107 = vld [vmem:[%s2] sm:$0xf]
    %v108 = vld [vmem:[%s2 + $0x4] sm:$0xf]
    %v111 = vunpack.c.l.b16 %v107
    %v112 = vunpack.c.l.b16 %v108
    %v113 = vpack.c.b16 %v112, %v111
    %vm115 = vcmask 130048
    %v117 = vsel %vm115, %v86, 0
    %v120 = vsel %vm115, %v87, 0
    %122 = vmatprep.subr.bf16.mxu0 0
    %123 = vmatpush1.bf16.msra.mxu0 %v113
    %124 = vmatprep.subr.bf16.mxu0 0
    %125 = vmatpush1.bf16.msra.mxu0 0
    %126 = vmatprep.subr.bf16.mxu0 0
    %127 = vmatpush1.bf16.msra.mxu0 0
    %128 = vmatprep.subr.bf16.mxu0 0
    %129 = vmatpush1.bf16.msra.mxu0 0
    %130 = vmatprep.subr.bf16.mxu0 0
    %131 = vmatpush1.bf16.msra.mxu0 0
    %132 = vmatprep.subr.bf16.mxu0 0
    %133 = vmatpush1.bf16.msra.mxu0 0
    %134 = vmatprep.subr.bf16.mxu0 0
    %135 = vmatpush1.bf16.msra.mxu0 0
    %136 = vmatprep.subr.bf16.mxu0 0
    %137 = vmatpush1.bf16.msra.mxu0 0
    %138 = vmatprep.subr.bf16.mxu0 0
    %139 = vmatpush1.bf16.msra.mxu0 0
    %140 = vmatprep.subr.bf16.mxu0 0
    %141 = vmatpush1.bf16.msra.mxu0 0
    %142 = vmatprep.subr.bf16.mxu0 0
    %143 = vmatpush1.bf16.msra.mxu0 0
    %144 = vmatprep.subr.bf16.mxu0 0
    %145 = vmatpush1.bf16.msra.mxu0 0
    %146 = vmatprep.subr.bf16.mxu0 0
    %147 = vmatpush1.bf16.msra.mxu0 0
    %148 = vmatprep.subr.bf16.mxu0 0
    %149 = vmatpush1.bf16.msra.mxu0 0
    %150 = vmatprep.subr.bf16.mxu0 0
    %151 = vmatpush1.bf16.msra.mxu0 0
    %152 = vmatprep.subr.bf16.mxu0 0
    %153 = vmatpush1.bf16.msra.mxu0 0
    %154 = vmatprep.mubr.bf16.mxu0 0
    %155 = vmatmul.mubr.bf16.gmra.mrb[0].mxu0 %v117
    %v156 = vpop.f32.mrb[0].mxu0
    %v157 = vadd.f32 0.0, %v156
    %v158 = vpop.f32.mrb[0].mxu0
    %v159 = vpop.f32.mrb[0].mxu0
    %v160 = vadd.f32 0.0, %v159
    %v161 = vpop.f32.mrb[0].mxu0
    %162 = vmatprep.mubr.bf16.mxu0 0
    %163 = vmatmul.mubr.bf16.gmra.mrb[0].mxu0 %v120
    %v164 = vpop.f32.mrb[0].mxu0
    %v165 = vadd.f32 0.0, %v164
    %v166 = vpop.f32.mrb[0].mxu0
    %v167 = vpop.f32.mrb[0].mxu0
    %v168 = vadd.f32 0.0, %v167
    %v169 = vpop.f32.mrb[0].mxu0
    %170 = vdwg.mxu0
    %171 = vxpose.xlu0.b32.start [1/16] %v157, 128
    %172 = vxpose.xlu0.b32.cont [2/16] %v160, 128
    %173 = vxpose.xlu0.b32.cont [3/16] %v165, 128
    %174 = vxpose.xlu0.b32.cont [4/16] %v168, 128
    %175 = vxpose.xlu0.b32.cont [5/16] 0.0, 128
    %176 = vxpose.xlu0.b32.cont [6/16] 0.0, 128
    %177 = vxpose.xlu0.b32.cont [7/16] 0.0, 128
    %178 = vxpose.xlu0.b32.cont [8/16] 0.0, 128
    %179 = vxpose.xlu0.b32.cont [9/16] 0.0, 128
    %180 = vxpose.xlu0.b32.cont [10/16] 0.0, 128
    %181 = vxpose.xlu0.b32.cont [11/16] 0.0, 128
    %182 = vxpose.xlu0.b32.cont [12/16] 0.0, 128
    %183 = vxpose.xlu0.b32.cont [13/16] 0.0, 128
    %184 = vxpose.xlu0.b32.cont [14/16] 0.0, 128
    %185 = vxpose.xlu0.b32.cont [15/16] 0.0, 128
    %186 = vxpose.xlu0.b32.end [16/16] 0.0, 128
    %v187 = vpop.trf.xlu0
    %v188 = vpop.trf.xlu0
    %v189 = vpop.trf.xlu0
    %v190 = vpop.trf.xlu0
    %v191 = vpop.trf.xlu0
    %v192 = vpop.trf.xlu0
    %v193 = vpop.trf.xlu0
    %v194 = vpop.trf.xlu0
    %v195 = vpop.trf.xlu0
    %v196 = vpop.trf.xlu0
    %v197 = vpop.trf.xlu0
    %v198 = vpop.trf.xlu0
    %v199 = vpop.trf.xlu0
    %v200 = vpop.trf.xlu0
    %v201 = vpop.trf.xlu0
    %v202 = vpop.trf.xlu0
    %vm203 = vcmask 254976
    %204 = vst.msk [vmem:[#allocation2] sm:$0x3] %vm203, %v187
    %209 = vrot.lane.b32.xlu0 %v157, 126
    %v210 = vpop.permute.xlu0 %209
    %211 = vrot.lane.b32.xlu0 %v160, 126
    %v212 = vpop.permute.xlu0 %211
    %213 = vrot.lane.b32.xlu0 %v165, 126
    %v214 = vpop.permute.xlu0 %213
    %215 = vrot.lane.b32.xlu0 %v168, 126
    %v216 = vpop.permute.xlu0 %215
    %vm221 = vcmask 15360
    %222 = vst.msk [vmem:[%s5] sm:$0xff] %vm221, %v210
    %223 = vst.msk [vmem:[%s5 + $0x8] sm:$0xff] %vm221, %v212
    %224 = vst.msk [vmem:[%s5 + $0x10] sm:$0xff] %vm221, %v214
    %225 = vst.msk [vmem:[%s5 + $0x18] sm:$0xff] %vm221, %v216
    // Predicated region
    $region14: #{tpu_custom_call.1} parent=1 // pred_check
      _
    $region15: #{tpu_custom_call.1} parent=1 // pred_check_branch
      %227 = sbr.rel (0) target = $region17
    $region16: #{tpu_custom_call.1} parent=1 // pred_region
      _
    $region17: #{tpu_custom_call.1} parent=1 // pred_fallthru
      _
    // Predicated region
    $region18: #{tpu_custom_call.1} parent=1 // pred_check
      _
    $region19: #{tpu_custom_call.1} parent=1 // pred_check_branch
      %229 = sbr.rel (0) target = $region21
    $region20: #{tpu_custom_call.1} parent=1 // pred_region
      %s231 = ssub.s32 32, 32
      %232 = vsyncadd [#allocation3], %s231
      %s234 = sshll.u32 [#allocation2], 4
      %s235 = int_to_ptr.vmem [resolvable:$true] %s234
      %237 = dma.vmem_to_hbm [thread:$0]  %s235, 32, %s4, [#allocation3]
    $region21: #{tpu_custom_call.1} parent=1 // pred_fallthru
      _
    // Predicated region
    $region22: #{tpu_custom_call.1} parent=1 // pred_check
      _
    $region23: #{tpu_custom_call.1} parent=1 // pred_check_branch
      %239 = sbr.rel (0) target = $region25
    $region24: #{tpu_custom_call.1} parent=1 // pred_region
      _
    $region25: #{tpu_custom_call.1} parent=1 // pred_fallthru
      _
    // Predicated region
    $region26: #{tpu_custom_call.1} parent=1 // pred_check
      _
    $region27: #{tpu_custom_call.1} parent=1 // pred_check_branch
      %241 = sbr.rel (0) target = $region29
    $region28: #{tpu_custom_call.1} parent=1 // pred_region
      _
    $region29: #{tpu_custom_call.1} parent=1 // pred_fallthru
      _
    // Predicated region
    $region30: #{tpu_custom_call.1} parent=1 // pred_check
      _
    $region31: #{tpu_custom_call.1} parent=1 // pred_check_branch
      %243 = sbr.rel (0) target = $region33
    $region32: #{tpu_custom_call.1} parent=1 // pred_region
      %244 = dma.done [#allocation3], 32
    $region33: #{tpu_custom_call.1} parent=1 // pred_fallthru
      _
    // Predicated region
    $region34: #{tpu_custom_call.1} parent=1 // pred_check
      _
    $region35: #{tpu_custom_call.1} parent=1 // pred_check_branch
      %246 = sbr.rel (0) target = $region37
    $region36: #{tpu_custom_call.1} parent=1 // pred_region
      _
    $region37: #{tpu_custom_call.1} parent=1 // pred_fallthru
      _
    %247 = vsyncpa [#allocation3], 1

</llo_original>
